<compile_context>
chip_gen: v6e
topology: v6e:2x2x1
jax: 0.10.0
libtpu: 0.0.40
codegen_flags: <defaults>
</compile_context>

<pallas_src>
import jax
import jax.numpy as jnp
from jax import lax
from jax.experimental import pallas as pl
from jax.experimental.pallas import tpu as pltpu


# ----------------------------------------------------------------------------
# Fused kernel: nearest-codebook lookup + encode MLP (one batch tile per step)
# ----------------------------------------------------------------------------
def _fused_prior_kernel(codes_ref, cb_ref, cbsq_ref, cbw1_ref, b1_ref,
                        w2_ref, b2_ref, out_ref):
    x = codes_ref[...]                                   # (TB, C) f32
    cb = cb_ref[...]                                     # (N, C)  f32

    # distances up to a per-row constant:  d[b,n] = ||cb[n]||^2 - 2 <x[b], cb[n]>
    # (the ||x[b]||^2 term is constant per row and cannot change the argmin)
    xc = lax.dot_general(x, cb, (((1,), (1,)), ((), ())),
                         preferred_element_type=jnp.float32)         # (TB, N) MXU
    d = cbsq_ref[...] - 2.0 * xc                                     # (TB, N)

    # argmin with first-index tie-break -> exact one-hot row selector
    n = d.shape[-1]
    col = lax.broadcasted_iota(jnp.int32, d.shape, 1)
    dmin = jnp.min(d, axis=-1, keepdims=True)
    idx = jnp.min(jnp.where(d == dmin, col, n), axis=-1, keepdims=True)
    onehot = (col == idx).astype(jnp.bfloat16)                       # (TB, N)

    # gather + fc1 fused:  onehot @ (codebook @ w1) == fc1(prev_code)
    h = jnp.dot(onehot, cbw1_ref[...],
                preferred_element_type=jnp.float32) + b1_ref[...]    # (TB, H) f32
    h = jnp.maximum(h, 0.0)

    # fused, lane-padded heads:  [mu || logstd || zero-pad]  -> (TB, 128)
    out_ref[...] = (jnp.dot(h.astype(jnp.bfloat16), w2_ref[...],
                            preferred_element_type=jnp.float32) + b2_ref[...])


# ----------------------------------------------------------------------------
# Parameter init (PyTorch-Linear-style) + preprocessing for the kernel layout
# ----------------------------------------------------------------------------
def init_params(key, code_len, codebook_size, hidden=512):
    """U(-1/sqrt(fan_in), 1/sqrt(fan_in)) Linear init, then:
       * cb_w1   = codebook @ w1           (N, H)  bf16   (gather+fc1 fusion)
       * w2/b2   = [w2u || w2s] zero-padded to lane width 128  (bf16 / f32)
       * cb_sq   = row-wise ||codebook||^2 (1, N)  f32
    """
    ks = jax.random.split(key, 7)

    def lin(kw, kb, fan_in, fan_out):
        bound = 1.0 / jnp.sqrt(fan_in)
        w = jax.random.uniform(kw, (fan_in, fan_out), jnp.float32, -bound, bound)
        b = jax.random.uniform(kb, (1, fan_out), jnp.float32, -bound, bound)
        return w, b

    w1, b1 = lin(ks[0], ks[1], code_len, hidden)
    w2u, b2u = lin(ks[2], ks[3], hidden, code_len)
    w2s, b2s = lin(ks[4], ks[5], hidden, code_len)
    codebook = jax.random.normal(ks[6], (codebook_size, code_len), jnp.float32)

    out_w = max(128, ((2 * code_len + 127) // 128) * 128)   # lane-dense head width
    w2 = jnp.zeros((hidden, out_w), jnp.float32).at[:, :2 * code_len].set(
        jnp.concatenate([w2u, w2s], axis=1))
    b2 = jnp.zeros((1, out_w), jnp.float32).at[:, :2 * code_len].set(
        jnp.concatenate([b2u, b2s], axis=1))

    return dict(
        codebook=codebook,                                      # (N, C) f32 (distances)
        cb_sq=jnp.sum(codebook * codebook, axis=-1)[None, :],   # (1, N) f32
        cb_w1=(codebook @ w1).astype(jnp.bfloat16),             # (N, H) bf16
        b1=b1,                                                  # (1, H) f32
        w2=w2.astype(jnp.bfloat16),                             # (H, 128) bf16
        b2=b2,                                                  # (1, 128) f32
    )


# ----------------------------------------------------------------------------
# Forward wrapper
# ----------------------------------------------------------------------------
def slow_prior_forward(codes, params):
    """codes: (B, code_len) f32. Returns (mu, logstd), each (B, code_len).

    # TODO(synk): the reference uses a stateful sklearn KNN with a `seen` set and
    # random.choice among the k nearest unseen codes; that bookkeeping has no clean
    # Pallas equivalent. We deterministically take the single nearest codebook entry.
    """
    B, C = codes.shape
    N = params["codebook"].shape[0]
    H = params["cb_w1"].shape[1]
    OUT = params["w2"].shape[1]

    # Batch tile: stream TB-row tiles while weights stay resident in VMEM.
    TB = 128 if B >= 128 else ((B + 7) // 8) * 8
    Bp = pl.cdiv(B, TB) * TB
    x = codes if Bp == B else jnp.pad(codes, ((0, Bp - B), (0, 0)))
    grid = (Bp // TB,)

    def const(shape):
        return pl.BlockSpec(shape, lambda i: tuple(0 for _ in shape))

    flops = 2 * Bp * N * C + 2 * Bp * N * H + 2 * Bp * H * OUT
    bytes_accessed = (x.size * 4 + params["codebook"].size * 4
                      + params["cb_sq"].size * 4 + params["cb_w1"].size * 2
                      + params["b1"].size * 4 + params["w2"].size * 2
                      + params["b2"].size * 4 + Bp * OUT * 4)

    out = pl.pallas_call(
        _fused_prior_kernel,
        out_shape=jax.ShapeDtypeStruct((Bp, OUT), jnp.float32),
        grid=grid,
        in_specs=[
            pl.BlockSpec((TB, C), lambda i: (i, 0)),   # codes: streamed per tile
            const((N, C)),                             # codebook (f32, distances)
            const((1, N)),                             # codebook squared norms
            const((N, H)),                             # cb_w1 (bf16, gather+fc1)
            const((1, H)),                             # b1
            const((H, OUT)),                           # fused, padded w2 (bf16)
            const((1, OUT)),                           # fused, padded b2
        ],
        out_specs=pl.BlockSpec((TB, OUT), lambda i: (i, 0)),
        compiler_params=pltpu.CompilerParams(dimension_semantics=("parallel",)),
        cost_estimate=pl.CostEstimate(flops=flops, transcendentals=0,
                                      bytes_accessed=bytes_accessed),
    )(x, params["codebook"], params["cb_sq"], params["cb_w1"],
      params["b1"], params["w2"], params["b2"])

    return out[:B, :C], out[:B, C:2 * C]


if __name__ == "__main__":
    code_len = 32
    codebook_size = 64
    batch = 8

    key = jax.random.PRNGKey(0)
    kp, kx = jax.random.split(key)
    params = init_params(kp, code_len, codebook_size)
    codes = jax.random.normal(kx, (batch, code_len), jnp.float32)

    mu, logstd = slow_prior_forward(codes, params)
    jax.block_until_ready((mu, logstd))

    assert mu.shape == (batch, code_len) and logstd.shape == (batch, code_len)

    # sanity check against a pure-JAX reference of the same math (f32 activations)
    cb = params["codebook"]
    d_ref = params["cb_sq"] - 2.0 * codes @ cb.T                      # (B, N)
    idx = jnp.argmin(d_ref, axis=-1)                                  # (B,)
    h_ref = jnp.maximum(params["cb_w1"].astype(jnp.float32)[idx] + params["b1"], 0.0)
    out_ref = h_ref @ params["w2"].astype(jnp.float32) + params["b2"]
    mu_ref, ls_ref = out_ref[:, :code_len], out_ref[:, code_len:2 * code_len]
    assert jnp.allclose(mu, mu_ref, atol=2e-2, rtol=2e-2)
    assert jnp.allclose(logstd, ls_ref, atol=2e-2, rtol=2e-2)

    print("KERNEL_OK")
</pallas_src>

<mosaic_0001>
module attributes {stable_mosaic.version = 11 : i64} {
  func.func @_fused_prior_kernel(%arg0: i32, %arg1: memref<8x32xf32, #tpu.memory_space<vmem>>, %arg2: memref<64x32xf32, #tpu.memory_space<vmem>>, %arg3: memref<1x64xf32, #tpu.memory_space<vmem>>, %arg4: memref<64x512xbf16, #tpu.memory_space<vmem>>, %arg5: memref<1x512xf32, #tpu.memory_space<vmem>>, %arg6: memref<512x128xbf16, #tpu.memory_space<vmem>>, %arg7: memref<1x128xf32, #tpu.memory_space<vmem>>, %arg8: memref<8x128xf32, #tpu.memory_space<vmem>>) attributes {dimension_semantics = [#tpu.dimension_semantics<parallel>], iteration_bounds = array<i64: 1>, scalar_prefetch = 0 : i64, scratch_operands = 0 : i64, tpu.core_type = #tpu.core_type<tc>, window_params = [{transform_indices = @transform_0, window_bounds = array<i64: 8, 32>}, {pipeline_mode = #tpu.pipeline_mode<synchronous>, transform_indices = @transform_1, window_bounds = array<i64: 64, 32>}, {pipeline_mode = #tpu.pipeline_mode<synchronous>, transform_indices = @transform_2, window_bounds = array<i64: 1, 64>}, {pipeline_mode = #tpu.pipeline_mode<synchronous>, transform_indices = @transform_3, window_bounds = array<i64: 64, 512>}, {pipeline_mode = #tpu.pipeline_mode<synchronous>, transform_indices = @transform_4, window_bounds = array<i64: 1, 512>}, {pipeline_mode = #tpu.pipeline_mode<synchronous>, transform_indices = @transform_5, window_bounds = array<i64: 512, 128>}, {pipeline_mode = #tpu.pipeline_mode<synchronous>, transform_indices = @transform_6, window_bounds = array<i64: 1, 128>}, {transform_indices = @transform_7, window_bounds = array<i64: 8, 128>}]} {
    %c0 = arith.constant 0 : index
    %c0_0 = arith.constant 0 : index
    %0 = vector.load %arg1[%c0, %c0_0] : memref<8x32xf32, #tpu.memory_space<vmem>>, vector<8x32xf32>
    %c0_1 = arith.constant 0 : index
    %c0_2 = arith.constant 0 : index
    %1 = vector.load %arg2[%c0_1, %c0_2] : memref<64x32xf32, #tpu.memory_space<vmem>>, vector<64x32xf32>
    %cst = arith.constant dense<0.000000e+00> : vector<8x64xf32>
    %2 = tpu.matmul %0, %1, %cst {dimension_numbers = #tpu.dot_dimension_numbers<[1], [1], [0], [0], [0, 0, 1, 0], [], []>} : vector<8x32xf32>, vector<64x32xf32>, vector<8x64xf32> -> vector<8x64xf32>
    %c0_3 = arith.constant 0 : index
    %c0_4 = arith.constant 0 : index
    %3 = vector.load %arg3[%c0_3, %c0_4] : memref<1x64xf32, #tpu.memory_space<vmem>>, vector<1x64xf32>
    %cst_5 = arith.constant 2.000000e+00 : f32
    %4 = vector.broadcast %cst_5 : f32 to vector<8x64xf32>
    %5 = arith.mulf %4, %2 : vector<8x64xf32>
    %6 = vector.broadcast %3 : vector<1x64xf32> to vector<8x64xf32>
    %7 = arith.subf %6, %5 : vector<8x64xf32>
    %8 = tpu.iota {dimensions = array<i32: 1>} : vector<8x64xi32>
    %cst_6 = arith.constant dense<0x7F800000> : vector<8xf32>
    %9 = vector.multi_reduction <minimumf>, %7, %cst_6 [1] : vector<8x64xf32> to vector<8xf32>
    %10 = vector.shape_cast %9 : vector<8xf32> to vector<8x1xf32>
    %11 = vector.broadcast %10 : vector<8x1xf32> to vector<8x64xf32>
    %12 = arith.cmpf oeq, %7, %11 : vector<8x64xf32>
    %c64_i32 = arith.constant 64 : i32
    %13 = vector.broadcast %c64_i32 : i32 to vector<8x64xi32>
    %14 = arith.select %12, %8, %13 : vector<8x64xi1>, vector<8x64xi32>
    %cst_7 = arith.constant dense<2147483647> : vector<8xi32>
    %15 = vector.multi_reduction <minsi>, %14, %cst_7 [1] : vector<8x64xi32> to vector<8xi32>
    %16 = vector.shape_cast %15 : vector<8xi32> to vector<8x1xi32>
    %17 = vector.broadcast %16 : vector<8x1xi32> to vector<8x64xi32>
    %18 = arith.cmpi eq, %8, %17 : vector<8x64xi32>
    %19 = arith.extui %18 : vector<8x64xi1> to vector<8x64xi32>
    %20 = arith.sitofp %19 : vector<8x64xi32> to vector<8x64xf32>
    %21 = arith.truncf %20 : vector<8x64xf32> to vector<8x64xbf16>
    %c0_8 = arith.constant 0 : index
    %c0_9 = arith.constant 0 : index
    %22 = vector.load %arg4[%c0_8, %c0_9] : memref<64x512xbf16, #tpu.memory_space<vmem>>, vector<64x512xbf16>
    %cst_10 = arith.constant dense<0.000000e+00> : vector<8x512xf32>
    %23 = tpu.matmul %21, %22, %cst_10 {dimension_numbers = #tpu.dot_dimension_numbers<[1], [0], [0], [1], [0, 0, 1, 1], [], []>} : vector<8x64xbf16>, vector<64x512xbf16>, vector<8x512xf32> -> vector<8x512xf32>
    %c0_11 = arith.constant 0 : index
    %c0_12 = arith.constant 0 : index
    %24 = vector.load %arg5[%c0_11, %c0_12] : memref<1x512xf32, #tpu.memory_space<vmem>>, vector<1x512xf32>
    %25 = vector.broadcast %24 : vector<1x512xf32> to vector<8x512xf32>
    %26 = arith.addf %23, %25 : vector<8x512xf32>
    %cst_13 = arith.constant 0.000000e+00 : f32
    %27 = vector.broadcast %cst_13 : f32 to vector<8x512xf32>
    %28 = arith.maximumf %26, %27 : vector<8x512xf32>
    %29 = arith.truncf %28 : vector<8x512xf32> to vector<8x512xbf16>
    %c0_14 = arith.constant 0 : index
    %c0_15 = arith.constant 0 : index
    %30 = vector.load %arg6[%c0_14, %c0_15] : memref<512x128xbf16, #tpu.memory_space<vmem>>, vector<512x128xbf16>
    %cst_16 = arith.constant dense<0.000000e+00> : vector<8x128xf32>
    %31 = tpu.matmul %29, %30, %cst_16 {dimension_numbers = #tpu.dot_dimension_numbers<[1], [0], [0], [1], [0, 0, 1, 1], [], []>} : vector<8x512xbf16>, vector<512x128xbf16>, vector<8x128xf32> -> vector<8x128xf32>
    %c0_17 = arith.constant 0 : index
    %c0_18 = arith.constant 0 : index
    %32 = vector.load %arg7[%c0_17, %c0_18] : memref<1x128xf32, #tpu.memory_space<vmem>>, vector<1x128xf32>
    %33 = vector.broadcast %32 : vector<1x128xf32> to vector<8x128xf32>
    %34 = arith.addf %31, %33 : vector<8x128xf32>
    %c0_19 = arith.constant 0 : index
    %c0_20 = arith.constant 0 : index
    %35 = vector.load %arg8[%c0_19, %c0_20] : memref<8x128xf32, #tpu.memory_space<vmem>>, vector<8x128xf32>
    tpu.vector_store %arg8[%c0_19, %c0_20], %34 {strides = array<i32>} : memref<8x128xf32, #tpu.memory_space<vmem>>, vector<8x128xf32>,
    return
  }
  func.func @transform_0(%arg0: i32) -> (i32, i32) {
    %c0_i32 = arith.constant 0 : i32
    %c0_i32_0 = arith.constant 0 : i32
    return %arg0, %c0_i32 : i32, i32
  }
  func.func @transform_1(%arg0: i32) -> (i32, i32) {
    %c0_i32 = arith.constant 0 : i32
    %c0_i32_0 = arith.constant 0 : i32
    %c0_i32_1 = arith.constant 0 : i32
    return %c0_i32, %c0_i32_0 : i32, i32
  }
  func.func @transform_2(%arg0: i32) -> (i32, i32) {
    %c0_i32 = arith.constant 0 : i32
    %c0_i32_0 = arith.constant 0 : i32
    %c0_i32_1 = arith.constant 0 : i32
    return %c0_i32, %c0_i32_0 : i32, i32
  }
  func.func @transform_3(%arg0: i32) -> (i32, i32) {
    %c0_i32 = arith.constant 0 : i32
    %c0_i32_0 = arith.constant 0 : i32
    %c0_i32_1 = arith.constant 0 : i32
    return %c0_i32, %c0_i32_0 : i32, i32
  }
  func.func @transform_4(%arg0: i32) -> (i32, i32) {
    %c0_i32 = arith.constant 0 : i32
    %c0_i32_0 = arith.constant 0 : i32
    %c0_i32_1 = arith.constant 0 : i32
    return %c0_i32, %c0_i32_0 : i32, i32
  }
  func.func @transform_5(%arg0: i32) -> (i32, i32) {
    %c0_i32 = arith.constant 0 : i32
    %c0_i32_0 = arith.constant 0 : i32
    %c0_i32_1 = arith.constant 0 : i32
    return %c0_i32, %c0_i32_0 : i32, i32
  }
  func.func @transform_6(%arg0: i32) -> (i32, i32) {
    %c0_i32 = arith.constant 0 : i32
    %c0_i32_0 = arith.constant 0 : i32
    %c0_i32_1 = arith.constant 0 : i32
    return %c0_i32, %c0_i32_0 : i32, i32
  }
  func.func @transform_7(%arg0: i32) -> (i32, i32) {
    %c0_i32 = arith.constant 0 : i32
    %c0_i32_0 = arith.constant 0 : i32
    return %arg0, %c0_i32 : i32, i32
  }
}

</mosaic_0001>

<llo_original>
// kernel: tpu_custom_call.1
$region0: #{tpu_custom_call.1}
  #allocation0 [shape = 'u32[]', space=smem, size = 0x4, offset = 0x4, fixed_abs, tag = 'smem constant byte address 0x4 - core index']
  #allocation1 [shape = 'u32[144,128]{1,0:T(1,128)}', space=vmem, size = 0x12000, scoped, tag = 'internal scratch']
  %s0 = inlined_call_operand.vmem [shape: f32[8,32], index: 0, kind: input, shape index: {}]
  %s1 = inlined_call_operand.vmem [shape: f32[64,32], index: 1, kind: input, shape index: {}]
  %s2 = inlined_call_operand.vmem [shape: f32[1,64], index: 2, kind: input, shape index: {}]
  %s3 = inlined_call_operand.hbm [shape: bf16[64,512], index: 3, kind: input, shape index: {}]
  %s4 = inlined_call_operand.vmem [shape: f32[1,512], index: 4, kind: input, shape index: {}]
  %s5 = inlined_call_operand.hbm [shape: bf16[512,128], index: 5, kind: input, shape index: {}]
  %s6 = inlined_call_operand.vmem [shape: f32[1,128], index: 6, kind: input, shape index: {}]
  %s7 = inlined_call_operand.hbm [shape: f32[8,128], index: 7, kind: output, shape index: {}]
  %s8 = sld [smem:[#allocation0]]
  $region46: #{tpu_custom_call.1} parent=0
    _
  %s10 = ssub.s32 1, %s8
  %s11 = scalar_select 0, %s10, %s8
  $region1: #{tpu_custom_call.1} parent=0
    #allocation2 [shape = 'u8[65536]{0}', space=vmem, size = 0x10000, scoped, tag = 'input window, operand 3, single buffered']
    #allocation3 [shape = 's32[1]{0}', space=sflag, size = 0x4, scoped, tag = 'scoped memory for tpu_custom_call.1']
    #allocation4 [shape = 's32[1]{0}', space=sflag, size = 0x4, scoped, tag = 'scoped memory for tpu_custom_call.1']
    #allocation5 [shape = 'u8[131072]{0}', space=vmem, size = 0x20000, scoped, tag = 'input window, operand 5, single buffered']
    #allocation6 [shape = 's32[1]{0}', space=sflag, size = 0x4, scoped, tag = 'scoped memory for tpu_custom_call.1']
    #allocation7 [shape = 'u8[4096]{0}', space=vmem, size = 0x1000, scoped, tag = 'output window, operand 0, single buffered']
    %12 = vsyncpa [#allocation3], 0
    %13 = vsyncpa [#allocation6], 0
    %14 = vsyncpa [#allocation4], 0
    // Predicated region
    $region2: #{tpu_custom_call.1} parent=1 // pred_check
      _
    $region3: #{tpu_custom_call.1} parent=1 // pred_check_branch
      %16 = sbr.rel (0) target = $region5
    $region4: #{tpu_custom_call.1} parent=1 // pred_region
      _
    $region5: #{tpu_custom_call.1} parent=1 // pred_fallthru
      _
    // Predicated region
    $region6: #{tpu_custom_call.1} parent=1 // pred_check
      _
    $region7: #{tpu_custom_call.1} parent=1 // pred_check_branch
      %18 = sbr.rel (0) target = $region9
    $region8: #{tpu_custom_call.1} parent=1 // pred_region
      _
    $region9: #{tpu_custom_call.1} parent=1 // pred_fallthru
      _
    // Predicated region
    $region10: #{tpu_custom_call.1} parent=1 // pred_check
      _
    $region11: #{tpu_custom_call.1} parent=1 // pred_check_branch
      %20 = sbr.rel (0) target = $region13
    $region12: #{tpu_custom_call.1} parent=1 // pred_region
      _
    $region13: #{tpu_custom_call.1} parent=1 // pred_fallthru
      _
    // Predicated region
    $region14: #{tpu_custom_call.1} parent=1 // pred_check
      _
    $region15: #{tpu_custom_call.1} parent=1 // pred_check_branch
      %22 = sbr.rel (0) target = $region17
    $region16: #{tpu_custom_call.1} parent=1 // pred_region
      %s24 = ssub.s32 2048, 2048
      %25 = vsyncadd [#allocation3], %s24
      %s26 = sshll.u32 [#allocation2], 4
      %s27 = int_to_ptr.vmem [resolvable:$true] %s26
      %32 = dma.hbm_to_vmem [thread:$0]  %s3, 2048, %s27, [#allocation3], 256, 256, 16
    $region17: #{tpu_custom_call.1} parent=1 // pred_fallthru
      _
    // Predicated region
    $region18: #{tpu_custom_call.1} parent=1 // pred_check
      _
    $region19: #{tpu_custom_call.1} parent=1 // pred_check_branch
      %34 = sbr.rel (0) target = $region21
    $region20: #{tpu_custom_call.1} parent=1 // pred_region
      _
    $region21: #{tpu_custom_call.1} parent=1 // pred_fallthru
      _
    // Predicated region
    $region22: #{tpu_custom_call.1} parent=1 // pred_check
      _
    $region23: #{tpu_custom_call.1} parent=1 // pred_check_branch
      %36 = sbr.rel (0) target = $region25
    $region24: #{tpu_custom_call.1} parent=1 // pred_region
      %s38 = ssub.s32 4096, 4096
      %39 = vsyncadd [#allocation6], %s38
      %s40 = sshll.u32 [#allocation5], 4
      %s41 = int_to_ptr.vmem [resolvable:$true] %s40
      %46 = dma.hbm_to_vmem [thread:$0]  %s5, 4096, %s41, [#allocation6], 64, 64, 4
    $region25: #{tpu_custom_call.1} parent=1 // pred_fallthru
      _
    // Predicated region
    $region26: #{tpu_custom_call.1} parent=1 // pred_check
      _
    $region27: #{tpu_custom_call.1} parent=1 // pred_check_branch
      %48 = sbr.rel (0) target = $region29
    $region28: #{tpu_custom_call.1} parent=1 // pred_region
      _
    $region29: #{tpu_custom_call.1} parent=1 // pred_fallthru
      _
    // Predicated region
    $region30: #{tpu_custom_call.1} parent=1 // pred_check
      _
    $region31: #{tpu_custom_call.1} parent=1 // pred_check_branch
      %50 = sbr.rel (0) target = $region33
    $region32: #{tpu_custom_call.1} parent=1 // pred_region
      %51 = dma.done [#allocation3], 2048
    $region33: #{tpu_custom_call.1} parent=1 // pred_fallthru
      _
    // Predicated region
    $region34: #{tpu_custom_call.1} parent=1 // pred_check
      _
    $region35: #{tpu_custom_call.1} parent=1 // pred_check_branch
      %53 = sbr.rel (0) target = $region37
    $region36: #{tpu_custom_call.1} parent=1 // pred_region
      %54 = dma.done [#allocation6], 4096
    $region37: #{tpu_custom_call.1} parent=1 // pred_fallthru
      _
    %v56 = vld [vmem:[%s0] sm:$0xff]
    %v57 = vld [vmem:[%s1] sm:$0xff]
    %v58 = vld [vmem:[%s1 + $0x8] sm:$0xff]
    %v59 = vld [vmem:[%s1 + $0x10] sm:$0xff]
    %v60 = vld [vmem:[%s1 + $0x18] sm:$0xff]
    %v61 = vld [vmem:[%s1 + $0x20] sm:$0xff]
    %v62 = vld [vmem:[%s1 + $0x28] sm:$0xff]
    %v63 = vld [vmem:[%s1 + $0x30] sm:$0xff]
    %v64 = vld [vmem:[%s1 + $0x38] sm:$0xff]
    %vm65 = vcmask 261120
    %v67 = vsel %vm65, %v56, 0
    %v70 = vsel %vm65, %v57, 0
    %v73 = vsel %vm65, %v58, 0
    %v76 = vsel %vm65, %v59, 0
    %v79 = vsel %vm65, %v60, 0
    %v82 = vsel %vm65, %v61, 0
    %v85 = vsel %vm65, %v62, 0
    %v88 = vsel %vm65, %v63, 0
    %v91 = vsel %vm65, %v64, 0
    %93 = vmatprep.subr.mxu0 0.0
    %94 = vmatpush1.xpose.msra.mxu0 0.0
    %95 = vmatprep.subr.mxu0 0.0
    %96 = vmatpush1.xpose.msra.mxu0 0.0
    %97 = vmatprep.subr.mxu0 0.0
    %98 = vmatpush1.xpose.msra.mxu0 0.0
    %99 = vmatprep.subr.mxu0 0.0
    %100 = vmatpush1.xpose.msra.mxu0 0.0
    %101 = vmatprep.subr.mxu0 0.0
    %102 = vmatpush1.xpose.msra.mxu0 0.0
    %103 = vmatprep.subr.mxu0 0.0
    %104 = vmatpush1.xpose.msra.mxu0 0.0
    %105 = vmatprep.subr.mxu0 0.0
    %106 = vmatpush1.xpose.msra.mxu0 0.0
    %107 = vmatprep.subr.mxu0 0.0
    %108 = vmatpush1.xpose.msra.mxu0 0.0
    %109 = vmatprep.subr.mxu0 0.0
    %110 = vmatpush1.xpose.msra.mxu0 %v91
    %111 = vmatprep.subr.mxu0 0.0
    %112 = vmatpush1.xpose.msra.mxu0 %v88
    %113 = vmatprep.subr.mxu0 0.0
    %114 = vmatpush1.xpose.msra.mxu0 %v85
    %115 = vmatprep.subr.mxu0 0.0
    %116 = vmatpush1.xpose.msra.mxu0 %v82
    %117 = vmatprep.subr.mxu0 0.0
    %118 = vmatpush1.xpose.msra.mxu0 %v79
    %119 = vmatprep.subr.mxu0 0.0
    %120 = vmatpush1.xpose.msra.mxu0 %v76
    %121 = vmatprep.subr.mxu0 0.0
    %122 = vmatpush1.xpose.msra.mxu0 %v73
    %123 = vmatprep.subr.mxu0 0.0
    %124 = vmatpush1.xpose.msra.mxu0 %v70
    %125 = vmatprep.subr.mxu0 0.0
    %126 = vmatpush2.xpose.msra.mxu0 0.0
    %127 = vmatprep.subr.mxu0 0.0
    %128 = vmatpush2.xpose.msra.mxu0 0.0
    %129 = vmatprep.subr.mxu0 0.0
    %130 = vmatpush2.xpose.msra.mxu0 0.0
    %131 = vmatprep.subr.mxu0 0.0
    %132 = vmatpush2.xpose.msra.mxu0 0.0
    %133 = vmatprep.subr.mxu0 0.0
    %134 = vmatpush2.xpose.msra.mxu0 0.0
    %135 = vmatprep.subr.mxu0 0.0
    %136 = vmatpush2.xpose.msra.mxu0 0.0
    %137 = vmatprep.subr.mxu0 0.0
    %138 = vmatpush2.xpose.msra.mxu0 0.0
    %139 = vmatprep.subr.mxu0 0.0
    %140 = vmatpush2.xpose.msra.mxu0 0.0
    %141 = vmatprep.subr.mxu0 0.0
    %142 = vmatpush2.xpose.msra.mxu0 0.0
    %143 = vmatprep.subr.mxu0 0.0
    %144 = vmatpush2.xpose.msra.mxu0 0.0
    %145 = vmatprep.subr.mxu0 0.0
    %146 = vmatpush2.xpose.msra.mxu0 0.0
    %147 = vmatprep.subr.mxu0 0.0
    %148 = vmatpush2.xpose.msra.mxu0 0.0
    %149 = vmatprep.subr.mxu0 0.0
    %150 = vmatpush2.xpose.msra.mxu0 0.0
    %151 = vmatprep.subr.mxu0 0.0
    %152 = vmatpush2.xpose.msra.mxu0 0.0
    %153 = vmatprep.subr.mxu0 0.0
    %154 = vmatpush2.xpose.msra.mxu0 0.0
    %155 = vmatprep.subr.mxu0 0.0
    %156 = vmatpush2.xpose.msra.mxu0 0.0
    %157 = vmatprep.mubr.f32.mxu0 0.0
    %158 = vmatmul.mubr.f32.gmra.mxu0 %v67
    %v159 = vpop.f32.mrf.mxu0
    %v160 = vadd.f32 0.0, %v159
    %v161 = vpop.f32.mrf.mxu0
    %162 = vdwg.mxu0
    %v163 = vld [vmem:[%s2] sm:$0x1]
    %v164 = vmul.f32 %v160, 2.0
    %v166 = vlaneseq
    %v167 = vshrl.u32 %v166, 7
    %v168 = vsub.s32 0, %v167
    %v169 = vrot.slane %v163, %v168
    %v171 = vsub.f32 %v169, %v164
    %v172 = vlaneseq
    %v173 = vand.u32 %v172, 127
    %vm174 = vcmask 523264
    %v175 = vsel %vm174, %v171, inf
    %176 = vmin.xlane.f32.xlu0 %v175
    %v177 = vpop.xlane.xlu0 %176
    %vm178 = vcmp.eq.f32.partialorder %v171, %v177
    %v179 = vsel %vm178, %v173, 64
    %v180 = vsel %vm174, %v179, 2147483647
    %v181 = vand.u32 %v180, 65535
    %v182 = vshra.s32 %v180, 16
    %v183 = vcvt.s32.f32 %v181
    %v184 = vcvt.s32.f32 %v182
    %185 = vmin.xlane.f32.xlu0 %v184
    %v186 = vpop.xlane.xlu0 %185
    %vm187 = vcmp.eq.f32.partialorder %v184, %v186
    %v188 = vsel %vm187, %v183, inf
    %189 = vmin.xlane.f32.xlu0 %v188
    %v190 = vpop.xlane.xlu0 %189
    %v191 = vcvt.f32.s32 %v190
    %v192 = vcvt.f32.s32 %v186
    %v193 = vshll.u32 %v192, 16
    %v194 = vadd.s32 %v193, %v191
    %vm195 = vcmp.eq.s32.totalorder %v173, %v194
    %v196 = vsel %vm195, 1, 0
    %v197 = vcvt.s32.f32 %v196
    %v198 = vpack.c.bf16 %v197, %v197
    %v199 = vld [vmem:[#allocation2] sm:$0xff]
    %v200 = vld [vmem:[#allocation2 + $0x8] sm:$0xff]
    %v201 = vld [vmem:[#allocation2 + $0x10] sm:$0xff]
    %v202 = vld [vmem:[#allocation2 + $0x18] sm:$0xff]
    %v203 = vld [vmem:[#allocation2 + $0x20] sm:$0xff]
    %v204 = vld [vmem:[#allocation2 + $0x28] sm:$0xff]
    %v205 = vld [vmem:[#allocation2 + $0x30] sm:$0xff]
    %v206 = vld [vmem:[#allocation2 + $0x38] sm:$0xff]
    %v207 = vld [vmem:[#allocation2 + $0x40] sm:$0xff]
    %v208 = vld [vmem:[#allocation2 + $0x48] sm:$0xff]
    %v209 = vld [vmem:[#allocation2 + $0x50] sm:$0xff]
    %v210 = vld [vmem:[#allocation2 + $0x58] sm:$0xff]
    %v211 = vld [vmem:[#allocation2 + $0x60] sm:$0xff]
    %v212 = vld [vmem:[#allocation2 + $0x68] sm:$0xff]
    %v213 = vld [vmem:[#allocation2 + $0x70] sm:$0xff]
    %v214 = vld [vmem:[#allocation2 + $0x78] sm:$0xff]
    %v215 = vld [vmem:[%s4] sm:$0xf]
    %v217 = vlaneseq
    %v218 = vshrl.u32 %v217, 7
    %v219 = vsub.s32 0, %v218
    %v220 = vrot.slane %v215, %v219
    %v221 = vlaneseq
    %v222 = vshrl.u32 %v221, 7
    %v223 = vsub.s32 1, %v222
    %v224 = vrot.slane %v215, %v223
    %v225 = vlaneseq
    %v226 = vshrl.u32 %v225, 7
    %v227 = vsub.s32 2, %v226
    %v228 = vrot.slane %v215, %v227
    %v229 = vlaneseq
    %v230 = vshrl.u32 %v229, 7
    %v231 = vsub.s32 3, %v230
    %v232 = vrot.slane %v215, %v231
    %v253 = vunpack.c.l.b16 %v199
    %v254 = vunpack.c.h.b16 %v199
    %v255 = vunpack.c.l.b16 %v200
    %v256 = vunpack.c.h.b16 %v200
    %v257 = vunpack.c.l.b16 %v201
    %v258 = vunpack.c.h.b16 %v201
    %v259 = vunpack.c.l.b16 %v202
    %v260 = vunpack.c.h.b16 %v202
    %v261 = vunpack.c.l.b16 %v203
    %v262 = vunpack.c.h.b16 %v203
    %v263 = vunpack.c.l.b16 %v204
    %v264 = vunpack.c.h.b16 %v204
    %v265 = vunpack.c.l.b16 %v205
    %v266 = vunpack.c.h.b16 %v205
    %v267 = vunpack.c.l.b16 %v206
    %v268 = vunpack.c.h.b16 %v206
    %v269 = vunpack.c.l.b16 %v207
    %v270 = vunpack.c.h.b16 %v207
    %v271 = vunpack.c.l.b16 %v208
    %v272 = vunpack.c.h.b16 %v208
    %v273 = vunpack.c.l.b16 %v209
    %v274 = vunpack.c.h.b16 %v209
    %v275 = vunpack.c.l.b16 %v210
    %v276 = vunpack.c.h.b16 %v210
    %v277 = vunpack.c.l.b16 %v211
    %v278 = vunpack.c.h.b16 %v211
    %v279 = vunpack.c.l.b16 %v212
    %v280 = vunpack.c.h.b16 %v212
    %v281 = vunpack.c.l.b16 %v213
    %v282 = vunpack.c.h.b16 %v213
    %v283 = vunpack.c.l.b16 %v214
    %v284 = vunpack.c.h.b16 %v214
    %v285 = vpack.c.b16 %v257, %v253
    %v286 = vpack.c.b16 %v258, %v254
    %v287 = vpack.c.b16 %v259, %v255
    %v288 = vpack.c.b16 %v260, %v256
    %v289 = vpack.c.b16 %v265, %v261
    %v290 = vpack.c.b16 %v266, %v262
    %v291 = vpack.c.b16 %v267, %v263
    %v292 = vpack.c.b16 %v268, %v264
    %v293 = vpack.c.b16 %v273, %v269
    %v294 = vpack.c.b16 %v274, %v270
    %v295 = vpack.c.b16 %v275, %v271
    %v296 = vpack.c.b16 %v276, %v272
    %v297 = vpack.c.b16 %v281, %v277
    %v298 = vpack.c.b16 %v282, %v278
    %v299 = vpack.c.b16 %v283, %v279
    %v300 = vpack.c.b16 %v284, %v280
    %v318 = vsel %vm174, %v198, 0
    %320 = vmatprep.subr.bf16.mxu0 0
    %321 = vmatpush1.bf16.msra.mxu0 0
    %322 = vmatprep.subr.bf16.mxu0 0
    %323 = vmatpush1.bf16.msra.mxu0 0
    %324 = vmatprep.subr.bf16.mxu0 0
    %325 = vmatpush1.bf16.msra.mxu0 0
    %326 = vmatprep.subr.bf16.mxu0 0
    %327 = vmatpush1.bf16.msra.mxu0 0
    %328 = vmatprep.subr.bf16.mxu0 %v298
    %329 = vmatpush1.bf16.msra.mxu0 %v297
    %330 = vmatprep.subr.bf16.mxu0 %v294
    %331 = vmatpush1.bf16.msra.mxu0 %v293
    %332 = vmatprep.subr.bf16.mxu0 %v290
    %333 = vmatpush1.bf16.msra.mxu0 %v289
    %334 = vmatprep.subr.bf16.mxu0 %v286
    %335 = vmatpush1.bf16.msra.mxu0 %v285
    %336 = vmatprep.subr.bf16.mxu0 0
    %337 = vmatpush2.bf16.msra.mxu0 0
    %338 = vmatprep.subr.bf16.mxu0 0
    %339 = vmatpush2.bf16.msra.mxu0 0
    %340 = vmatprep.subr.bf16.mxu0 0
    %341 = vmatpush2.bf16.msra.mxu0 0
    %342 = vmatprep.subr.bf16.mxu0 0
    %343 = vmatpush2.bf16.msra.mxu0 0
    %344 = vmatprep.subr.bf16.mxu0 0
    %345 = vmatpush2.bf16.msra.mxu0 0
    %346 = vmatprep.subr.bf16.mxu0 0
    %347 = vmatpush2.bf16.msra.mxu0 0
    %348 = vmatprep.subr.bf16.mxu0 0
    %349 = vmatpush2.bf16.msra.mxu0 0
    %350 = vmatprep.subr.bf16.mxu0 0
    %351 = vmatpush2.bf16.msra.mxu0 0
    %352 = vmatprep.mubr.bf16.mxu0 0
    %353 = vmatmul.mubr.bf16.gmra.mxu0 %v318
    %v354 = vpop.f32.mrf.mxu0
    %v355 = vadd.f32 %v220, %v354
    %v356 = vpop.f32.mrf.mxu0
    %v357 = vadd.f32 %v224, %v356
    %v358 = vpop.f32.mrf.mxu0
    %v359 = vpop.f32.mrf.mxu0
    %360 = vdwg.mxu0
    %361 = vmatprep.subr.bf16.mxu0 0
    %362 = vmatpush1.bf16.msra.mxu0 0
    %363 = vmatprep.subr.bf16.mxu0 0
    %364 = vmatpush1.bf16.msra.mxu0 0
    %365 = vmatprep.subr.bf16.mxu0 0
    %366 = vmatpush1.bf16.msra.mxu0 0
    %367 = vmatprep.subr.bf16.mxu0 0
    %368 = vmatpush1.bf16.msra.mxu0 0
    %369 = vmatprep.subr.bf16.mxu0 %v300
    %370 = vmatpush1.bf16.msra.mxu0 %v299
    %371 = vmatprep.subr.bf16.mxu0 %v296
    %372 = vmatpush1.bf16.msra.mxu0 %v295
    %373 = vmatprep.subr.bf16.mxu0 %v292
    %374 = vmatpush1.bf16.msra.mxu0 %v291
    %375 = vmatprep.subr.bf16.mxu0 %v288
    %376 = vmatpush1.bf16.msra.mxu0 %v287
    %377 = vmatprep.subr.bf16.mxu0 0
    %378 = vmatpush2.bf16.msra.mxu0 0
    %379 = vmatprep.subr.bf16.mxu0 0
    %380 = vmatpush2.bf16.msra.mxu0 0
    %381 = vmatprep.subr.bf16.mxu0 0
    %382 = vmatpush2.bf16.msra.mxu0 0
    %383 = vmatprep.subr.bf16.mxu0 0
    %384 = vmatpush2.bf16.msra.mxu0 0
    %385 = vmatprep.subr.bf16.mxu0 0
    %386 = vmatpush2.bf16.msra.mxu0 0
    %387 = vmatprep.subr.bf16.mxu0 0
    %388 = vmatpush2.bf16.msra.mxu0 0
    %389 = vmatprep.subr.bf16.mxu0 0
    %390 = vmatpush2.bf16.msra.mxu0 0
    %391 = vmatprep.subr.bf16.mxu0 0
    %392 = vmatpush2.bf16.msra.mxu0 0
    %393 = vmatprep.mubr.bf16.mxu0 0
    %394 = vmatmul.mubr.bf16.gmra.mxu0 %v318
    %v395 = vpop.f32.mrf.mxu0
    %v396 = vadd.f32 %v228, %v395
    %v397 = vpop.f32.mrf.mxu0
    %v398 = vadd.f32 %v232, %v397
    %v399 = vpop.f32.mrf.mxu0
    %v400 = vpop.f32.mrf.mxu0
    %401 = vdwg.mxu0
    %v402 = vmax.f32 %v355, 0.0
    %v403 = vmax.f32 %v357, 0.0
    %v404 = vmax.f32 %v396, 0.0
    %v405 = vmax.f32 %v398, 0.0
    %v406 = vpack.c.bf16 %v402, %v402
    %v407 = vpack.c.bf16 %v403, %v403
    %v408 = vpack.c.bf16 %v404, %v404
    %v409 = vpack.c.bf16 %v405, %v405
    %v410 = vld [vmem:[#allocation5] sm:$0xf]
    %v411 = vld [vmem:[#allocation5 + $0x4] sm:$0xf]
    %v412 = vld [vmem:[#allocation5 + $0x8] sm:$0xf]
    %v413 = vld [vmem:[#allocation5 + $0xc] sm:$0xf]
    %v414 = vld [vmem:[#allocation5 + $0x10] sm:$0xf]
    %v415 = vld [vmem:[#allocation5 + $0x14] sm:$0xf]
    %v416 = vld [vmem:[#allocation5 + $0x18] sm:$0xf]
    %v417 = vld [vmem:[#allocation5 + $0x1c] sm:$0xf]
    %v418 = vld [vmem:[#allocation5 + $0x20] sm:$0xf]
    %v419 = vld [vmem:[#allocation5 + $0x24] sm:$0xf]
    %v420 = vld [vmem:[#allocation5 + $0x28] sm:$0xf]
    %v421 = vld [vmem:[#allocation5 + $0x2c] sm:$0xf]
    %v422 = vld [vmem:[#allocation5 + $0x30] sm:$0xf]
    %v423 = vld [vmem:[#allocation5 + $0x34] sm:$0xf]
    %v424 = vld [vmem:[#allocation5 + $0x38] sm:$0xf]
    %v425 = vld [vmem:[#allocation5 + $0x3c] sm:$0xf]
    %v426 = vld [vmem:[#allocation5 + $0x40] sm:$0xf]
    %v427 = vld [vmem:[#allocation5 + $0x44] sm:$0xf]
    %v428 = vld [vmem:[#allocation5 + $0x48] sm:$0xf]
    %v429 = vld [vmem:[#allocation5 + $0x4c] sm:$0xf]
    %v430 = vld [vmem:[#allocation5 + $0x50] sm:$0xf]
    %v431 = vld [vmem:[#allocation5 + $0x54] sm:$0xf]
    %v432 = vld [vmem:[#allocation5 + $0x58] sm:$0xf]
    %v433 = vld [vmem:[#allocation5 + $0x5c] sm:$0xf]
    %v434 = vld [vmem:[#allocation5 + $0x60] sm:$0xf]
    %v435 = vld [vmem:[#allocation5 + $0x64] sm:$0xf]
    %v436 = vld [vmem:[#allocation5 + $0x68] sm:$0xf]
    %v437 = vld [vmem:[#allocation5 + $0x6c] sm:$0xf]
    %v438 = vld [vmem:[#allocation5 + $0x70] sm:$0xf]
    %v439 = vld [vmem:[#allocation5 + $0x74] sm:$0xf]
    %v440 = vld [vmem:[#allocation5 + $0x78] sm:$0xf]
    %v441 = vld [vmem:[#allocation5 + $0x7c] sm:$0xf]
    %v442 = vld [vmem:[#allocation5 + $0x80] sm:$0xf]
    %v443 = vld [vmem:[#allocation5 + $0x84] sm:$0xf]
    %v444 = vld [vmem:[#allocation5 + $0x88] sm:$0xf]
    %v445 = vld [vmem:[#allocation5 + $0x8c] sm:$0xf]
    %v446 = vld [vmem:[#allocation5 + $0x90] sm:$0xf]
    %v447 = vld [vmem:[#allocation5 + $0x94] sm:$0xf]
    %v448 = vld [vmem:[#allocation5 + $0x98] sm:$0xf]
    %v449 = vld [vmem:[#allocation5 + $0x9c] sm:$0xf]
    %v450 = vld [vmem:[#allocation5 + $0xa0] sm:$0xf]
    %v451 = vld [vmem:[#allocation5 + $0xa4] sm:$0xf]
    %v452 = vld [vmem:[#allocation5 + $0xa8] sm:$0xf]
    %v453 = vld [vmem:[#allocation5 + $0xac] sm:$0xf]
    %v454 = vld [vmem:[#allocation5 + $0xb0] sm:$0xf]
    %v455 = vld [vmem:[#allocation5 + $0xb4] sm:$0xf]
    %v456 = vld [vmem:[#allocation5 + $0xb8] sm:$0xf]
    %v457 = vld [vmem:[#allocation5 + $0xbc] sm:$0xf]
    %v458 = vld [vmem:[#allocation5 + $0xc0] sm:$0xf]
    %v459 = vld [vmem:[#allocation5 + $0xc4] sm:$0xf]
    %v460 = vld [vmem:[#allocation5 + $0xc8] sm:$0xf]
    %v461 = vld [vmem:[#allocation5 + $0xcc] sm:$0xf]
    %v462 = vld [vmem:[#allocation5 + $0xd0] sm:$0xf]
    %v463 = vld [vmem:[#allocation5 + $0xd4] sm:$0xf]
    %v464 = vld [vmem:[#allocation5 + $0xd8] sm:$0xf]
    %v465 = vld [vmem:[#allocation5 + $0xdc] sm:$0xf]
    %v466 = vld [vmem:[#allocation5 + $0xe0] sm:$0xf]
    %v467 = vld [vmem:[#allocation5 + $0xe4] sm:$0xf]
    %v468 = vld [vmem:[#allocation5 + $0xe8] sm:$0xf]
    %v469 = vld [vmem:[#allocation5 + $0xec] sm:$0xf]
    %v470 = vld [vmem:[#allocation5 + $0xf0] sm:$0xf]
    %v471 = vld [vmem:[#allocation5 + $0xf4] sm:$0xf]
    %v472 = vld [vmem:[#allocation5 + $0xf8] sm:$0xf]
    %v473 = vld [vmem:[#allocation5 + $0xfc] sm:$0xf]
    %v474 = vld [vmem:[%s6] sm:$0x1]
    %v476 = vlaneseq
    %v477 = vshrl.u32 %v476, 7
    %v478 = vsub.s32 0, %v477
    %v479 = vrot.slane %v474, %v478
    %v545 = vunpack.c.l.b16 %v410
    %v546 = vunpack.c.l.b16 %v411
    %v547 = vunpack.c.l.b16 %v412
    %v548 = vunpack.c.l.b16 %v413
    %v549 = vunpack.c.l.b16 %v414
    %v550 = vunpack.c.l.b16 %v415
    %v551 = vunpack.c.l.b16 %v416
    %v552 = vunpack.c.l.b16 %v417
    %v553 = vunpack.c.l.b16 %v418
    %v554 = vunpack.c.l.b16 %v419
    %v555 = vunpack.c.l.b16 %v420
    %v556 = vunpack.c.l.b16 %v421
    %v557 = vunpack.c.l.b16 %v422
    %v558 = vunpack.c.l.b16 %v423
    %v559 = vunpack.c.l.b16 %v424
    %v560 = vunpack.c.l.b16 %v425
    %v561 = vunpack.c.l.b16 %v426
    %v562 = vunpack.c.l.b16 %v427
    %v563 = vunpack.c.l.b16 %v428
    %v564 = vunpack.c.l.b16 %v429
    %v565 = vunpack.c.l.b16 %v430
    %v566 = vunpack.c.l.b16 %v431
    %v567 = vunpack.c.l.b16 %v432
    %v568 = vunpack.c.l.b16 %v433
    %v569 = vunpack.c.l.b16 %v434
    %v570 = vunpack.c.l.b16 %v435
    %v571 = vunpack.c.l.b16 %v436
    %v572 = vunpack.c.l.b16 %v437
    %v573 = vunpack.c.l.b16 %v438
    %v574 = vunpack.c.l.b16 %v439
    %v575 = vunpack.c.l.b16 %v440
    %v576 = vunpack.c.l.b16 %v441
    %v577 = vunpack.c.l.b16 %v442
    %v578 = vunpack.c.l.b16 %v443
    %v579 = vunpack.c.l.b16 %v444
    %v580 = vunpack.c.l.b16 %v445
    %v581 = vunpack.c.l.b16 %v446
    %v582 = vunpack.c.l.b16 %v447
    %v583 = vunpack.c.l.b16 %v448
    %v584 = vunpack.c.l.b16 %v449
    %v585 = vunpack.c.l.b16 %v450
    %v586 = vunpack.c.l.b16 %v451
    %v587 = vunpack.c.l.b16 %v452
    %v588 = vunpack.c.l.b16 %v453
    %v589 = vunpack.c.l.b16 %v454
    %v590 = vunpack.c.l.b16 %v455
    %v591 = vunpack.c.l.b16 %v456
    %v592 = vunpack.c.l.b16 %v457
    %v593 = vunpack.c.l.b16 %v458
    %v594 = vunpack.c.l.b16 %v459
    %v595 = vunpack.c.l.b16 %v460
    %v596 = vunpack.c.l.b16 %v461
    %v597 = vunpack.c.l.b16 %v462
    %v598 = vunpack.c.l.b16 %v463
    %v599 = vunpack.c.l.b16 %v464
    %v600 = vunpack.c.l.b16 %v465
    %v601 = vunpack.c.l.b16 %v466
    %v602 = vunpack.c.l.b16 %v467
    %v603 = vunpack.c.l.b16 %v468
    %v604 = vunpack.c.l.b16 %v469
    %v605 = vunpack.c.l.b16 %v470
    %v606 = vunpack.c.l.b16 %v471
    %v607 = vunpack.c.l.b16 %v472
    %v608 = vunpack.c.l.b16 %v473
    %v609 = vpack.c.b16 %v546, %v545
    %v610 = vpack.c.b16 %v548, %v547
    %v611 = vpack.c.b16 %v550, %v549
    %v612 = vpack.c.b16 %v552, %v551
    %v613 = vpack.c.b16 %v554, %v553
    %v614 = vpack.c.b16 %v556, %v555
    %v615 = vpack.c.b16 %v558, %v557
    %v616 = vpack.c.b16 %v560, %v559
    %v617 = vpack.c.b16 %v562, %v561
    %v618 = vpack.c.b16 %v564, %v563
    %v619 = vpack.c.b16 %v566, %v565
    %v620 = vpack.c.b16 %v568, %v567
    %v621 = vpack.c.b16 %v570, %v569
    %v622 = vpack.c.b16 %v572, %v571
    %v623 = vpack.c.b16 %v574, %v573
    %v624 = vpack.c.b16 %v576, %v575
    %v625 = vpack.c.b16 %v578, %v577
    %v626 = vpack.c.b16 %v580, %v579
    %v627 = vpack.c.b16 %v582, %v581
    %v628 = vpack.c.b16 %v584, %v583
    %v629 = vpack.c.b16 %v586, %v585
    %v630 = vpack.c.b16 %v588, %v587
    %v631 = vpack.c.b16 %v590, %v589
    %v632 = vpack.c.b16 %v592, %v591
    %v633 = vpack.c.b16 %v594, %v593
    %v634 = vpack.c.b16 %v596, %v595
    %v635 = vpack.c.b16 %v598, %v597
    %v636 = vpack.c.b16 %v600, %v599
    %v637 = vpack.c.b16 %v602, %v601
    %v638 = vpack.c.b16 %v604, %v603
    %v639 = vpack.c.b16 %v606, %v605
    %v640 = vpack.c.b16 %v608, %v607
    %673 = vmatprep.subr.bf16.mxu0 0
    %674 = vmatpush1.bf16.msra.mxu0 %v616
    %675 = vmatprep.subr.bf16.mxu0 0
    %676 = vmatpush1.bf16.msra.mxu0 %v615
    %677 = vmatprep.subr.bf16.mxu0 0
    %678 = vmatpush1.bf16.msra.mxu0 %v614
    %679 = vmatprep.subr.bf16.mxu0 0
    %680 = vmatpush1.bf16.msra.mxu0 %v613
    %681 = vmatprep.subr.bf16.mxu0 0
    %682 = vmatpush1.bf16.msra.mxu0 %v612
    %683 = vmatprep.subr.bf16.mxu0 0
    %684 = vmatpush1.bf16.msra.mxu0 %v611
    %685 = vmatprep.subr.bf16.mxu0 0
    %686 = vmatpush1.bf16.msra.mxu0 %v610
    %687 = vmatprep.subr.bf16.mxu0 0
    %688 = vmatpush1.bf16.msra.mxu0 %v609
    %689 = vmatprep.subr.bf16.mxu0 0
    %690 = vmatpush2.bf16.msra.mxu0 %v624
    %691 = vmatprep.subr.bf16.mxu0 0
    %692 = vmatpush2.bf16.msra.mxu0 %v623
    %693 = vmatprep.subr.bf16.mxu0 0
    %694 = vmatpush2.bf16.msra.mxu0 %v622
    %695 = vmatprep.subr.bf16.mxu0 0
    %696 = vmatpush2.bf16.msra.mxu0 %v621
    %697 = vmatprep.subr.bf16.mxu0 0
    %698 = vmatpush2.bf16.msra.mxu0 %v620
    %699 = vmatprep.subr.bf16.mxu0 0
    %700 = vmatpush2.bf16.msra.mxu0 %v619
    %701 = vmatprep.subr.bf16.mxu0 0
    %702 = vmatpush2.bf16.msra.mxu0 %v618
    %703 = vmatprep.subr.bf16.mxu0 0
    %704 = vmatpush2.bf16.msra.mxu0 %v617
    %705 = vmatprep.mubr.bf16.mxu0 %v407
    %706 = vmatmul.mubr.bf16.gmra.mxu0 %v406
    %v707 = vpop.f32.mrf.mxu0
    %v708 = vadd.f32 %v479, %v707
    %v709 = vpop.f32.mrf.mxu0
    %v710 = vpop.f32.mrf.mxu0
    %v711 = vpop.f32.mrf.mxu0
    %712 = vdwg.mxu0
    %713 = vmatprep.subr.bf16.mxu0 0
    %714 = vmatpush1.bf16.msra.mxu0 %v632
    %715 = vmatprep.subr.bf16.mxu0 0
    %716 = vmatpush1.bf16.msra.mxu0 %v631
    %717 = vmatprep.subr.bf16.mxu0 0
    %718 = vmatpush1.bf16.msra.mxu0 %v630
    %719 = vmatprep.subr.bf16.mxu0 0
    %720 = vmatpush1.bf16.msra.mxu0 %v629
    %721 = vmatprep.subr.bf16.mxu0 0
    %722 = vmatpush1.bf16.msra.mxu0 %v628
    %723 = vmatprep.subr.bf16.mxu0 0
    %724 = vmatpush1.bf16.msra.mxu0 %v627
    %725 = vmatprep.subr.bf16.mxu0 0
    %726 = vmatpush1.bf16.msra.mxu0 %v626
    %727 = vmatprep.subr.bf16.mxu0 0
    %728 = vmatpush1.bf16.msra.mxu0 %v625
    %729 = vmatprep.subr.bf16.mxu0 0
    %730 = vmatpush2.bf16.msra.mxu0 %v640
    %731 = vmatprep.subr.bf16.mxu0 0
    %732 = vmatpush2.bf16.msra.mxu0 %v639
    %733 = vmatprep.subr.bf16.mxu0 0
    %734 = vmatpush2.bf16.msra.mxu0 %v638
    %735 = vmatprep.subr.bf16.mxu0 0
    %736 = vmatpush2.bf16.msra.mxu0 %v637
    %737 = vmatprep.subr.bf16.mxu0 0
    %738 = vmatpush2.bf16.msra.mxu0 %v636
    %739 = vmatprep.subr.bf16.mxu0 0
    %740 = vmatpush2.bf16.msra.mxu0 %v635
    %741 = vmatprep.subr.bf16.mxu0 0
    %742 = vmatpush2.bf16.msra.mxu0 %v634
    %743 = vmatprep.subr.bf16.mxu0 0
    %744 = vmatpush2.bf16.msra.mxu0 %v633
    %745 = vmatprep.mubr.bf16.mxu0 %v409
    %746 = vmatmul.mubr.bf16.gmra.mxu0 %v408
    %v747 = vpop.f32.mrf.mxu0
    %v748 = vadd.f32 %v708, %v747
    %v749 = vpop.f32.mrf.mxu0
    %v750 = vpop.f32.mrf.mxu0
    %v751 = vpop.f32.mrf.mxu0
    %752 = vdwg.mxu0
    %753 = vst [vmem:[#allocation7] sm:$0xff] %v748
    // Predicated region
    $region38: #{tpu_custom_call.1} parent=1 // pred_check
      _
    $region39: #{tpu_custom_call.1} parent=1 // pred_check_branch
      %755 = sbr.rel (0) target = $region41
    $region40: #{tpu_custom_call.1} parent=1 // pred_region
      %s757 = ssub.s32 128, 128
      %758 = vsyncadd [#allocation4], %s757
      %s760 = sshll.u32 [#allocation7], 4
      %s761 = int_to_ptr.vmem [resolvable:$true] %s760
      %763 = dma.vmem_to_hbm [thread:$0]  %s761, 128, %s7, [#allocation4]
    $region41: #{tpu_custom_call.1} parent=1 // pred_fallthru
      _
    // Predicated region
    $region42: #{tpu_custom_call.1} parent=1 // pred_check
      _
    $region43: #{tpu_custom_call.1} parent=1 // pred_check_branch
      %765 = sbr.rel (0) target = $region45
    $region44: #{tpu_custom_call.1} parent=1 // pred_region
      %766 = dma.done [#allocation4], 128
    $region45: #{tpu_custom_call.1} parent=1 // pred_fallthru
      _
    %767 = vsyncpa [#allocation3], 1
    %768 = vsyncpa [#allocation6], 1
    %769 = vsyncpa [#allocation4], 1

</llo_original>
